<compile_context>
chip_gen: v6e
topology: v6e:2x2x1
jax: 0.10.0
libtpu: 0.0.40
codegen_flags: <defaults>
</compile_context>

<pallas_src>
import math

import jax
import jax.numpy as jnp
from jax import lax
from jax.experimental import pallas as pl
from jax.experimental.pallas import tpu as pltpu

_SCALE = 1.0 / math.sqrt(156.0)  # module divides by np.sqrt(156) regardless of d_k


def _round_up(x, m):
    return (x + m - 1) // m * m


def _sdpa_kernel(q_ref, k_ref, v_ref, ctx_ref, attn_ref):
    # q_ref:    (1, tq, Dk)  query tile for one (batch*head)
    # k_ref:    (1, Sk, Dk)  all keys for this (batch*head)   (VMEM-resident)
    # v_ref:    (1, Sk, Dv)  all values for this (batch*head) (VMEM-resident)
    # ctx_ref:  (1, tq, Dv)
    # attn_ref: (1, tq, Sk)

    # Fold the scale into Q ((tq,Dk) VPU work instead of (tq,Sk)), then cast
    # operands to bf16 so the MXU runs native single-pass bf16 with f32 acc.
    q = (q_ref[0] * _SCALE).astype(jnp.bfloat16)
    k = k_ref[0].astype(jnp.bfloat16)
    v = v_ref[0].astype(jnp.bfloat16)

    # scores = (Q*scale) @ K^T  — contract the feature axis (native trans_b).
    scores = lax.dot_general(
        q, k, (((1,), (1,)), ((), ())),
        preferred_element_type=jnp.float32)

    # Numerically-stable softmax over the key axis (f32; matches Softmax(dim=-1)).
    m = jnp.max(scores, axis=-1, keepdims=True)
    e = jnp.exp(scores - m)
    s = jnp.sum(e, axis=-1, keepdims=True)
    inv = pl.reciprocal(s, approx=True)   # EUP slot — no full-tile VPU divide
    p = e * inv

    attn_ref[0] = p.astype(attn_ref.dtype)

    # context = attn @ V  — bf16 operands, f32 accumulation.
    ctx = jnp.dot(p.astype(jnp.bfloat16), v, preferred_element_type=jnp.float32)
    ctx_ref[0] = ctx.astype(ctx_ref.dtype)


def scaled_dot_product_attention(q, k, v, *, tq=256, attn_dtype=None):
    """q: (..., Sq, Dk), k: (..., Sk, Dk), v: (..., Sk, Dv) -> (context, attn).

    attn_dtype: dtype of the returned attention matrix (default: q.dtype).
    Passing jnp.bfloat16 halves the dominant HBM writeback for large Sk.
    """
    lead = q.shape[:-2]
    Sq, Dk = q.shape[-2:]
    Sk = k.shape[-2]
    Dv = v.shape[-1]
    bh = math.prod(lead) if lead else 1
    attn_dtype = q.dtype if attn_dtype is None else jnp.dtype(attn_dtype)

    q3 = q.reshape(bh, Sq, Dk)
    k3 = k.reshape(bh, Sk, Dk)
    v3 = v.reshape(bh, Sk, Dv)

    # Pick the largest q-tile that divides Sq and keeps sublane alignment
    # (multiple of 8), falling back to the full axis for odd sequence lengths.
    tq = min(tq, Sq)
    if Sq % tq != 0 or tq % 8 != 0:
        cand = [c for c in (512, 256, 128, 64, 32, 16, 8) if c <= Sq and Sq % c == 0]
        tq = cand[0] if cand else Sq

    grid = (bh, Sq // tq)

    # --- VMEM budget with *lane-padded* dims (156 -> 256 lanes, etc.) so the
    # limit we request is honest on every generation (incl. v7x's 64 MiB).
    f32 = 4
    dk_p, dv_p = _round_up(Dk, 128), _round_up(Dv, 128)
    sk_sub, sk_lane = _round_up(Sk, 8), _round_up(Sk, 128)
    tq_sub = _round_up(tq, 8)
    per_copy = (
        sk_sub * dk_p * f32                                   # K block
        + sk_sub * dv_p * f32                                 # V block
        + tq_sub * dk_p * f32                                 # Q tile
        + tq_sub * dv_p * f32                                 # ctx tile
        + tq_sub * sk_lane * jnp.dtype(attn_dtype).itemsize   # attn tile
    )
    # Default double-buffering on every operand + 25% / 2 MiB headroom.
    vmem_limit = max(int(per_copy * 2 * 1.25) + (2 << 20), 16 << 20)

    itemsize = jnp.dtype(q.dtype).itemsize
    cost = pl.CostEstimate(
        flops=2 * bh * Sq * Sk * (Dk + Dv),
        transcendentals=bh * Sq * (Sk + 1),  # exp + reciprocal
        bytes_accessed=int(
            itemsize * (q3.size + k3.size + v3.size + bh * Sq * Dv)
            + jnp.dtype(attn_dtype).itemsize * bh * Sq * Sk
        ),
    )

    ctx3, attn3 = pl.pallas_call(
        _sdpa_kernel,
        out_shape=(
            jax.ShapeDtypeStruct((bh, Sq, Dv), q.dtype),
            jax.ShapeDtypeStruct((bh, Sq, Sk), attn_dtype),
        ),
        grid_spec=pltpu.PrefetchScalarGridSpec(
            num_scalar_prefetch=0,
            grid=grid,
            in_specs=[
                pl.BlockSpec((1, tq, Dk), lambda b, i: (b, i, 0)),
                pl.BlockSpec((1, Sk, Dk), lambda b, i: (b, 0, 0)),  # K resident over i
                pl.BlockSpec((1, Sk, Dv), lambda b, i: (b, 0, 0)),  # V resident over i
            ],
            out_specs=[
                pl.BlockSpec((1, tq, Dv), lambda b, i: (b, i, 0)),
                pl.BlockSpec((1, tq, Sk), lambda b, i: (b, i, 0)),  # lane-dense attn
            ],
        ),
        compiler_params=pltpu.CompilerParams(
            dimension_semantics=("parallel", "parallel"),
            vmem_limit_bytes=vmem_limit,
        ),
        cost_estimate=cost,
    )(q3, k3, v3)

    return ctx3.reshape(*lead, Sq, Dv), attn3.reshape(*lead, Sq, Sk)


def sdpa_ref(q, k, v):
    scores = jnp.matmul(q, jnp.swapaxes(k, -1, -2)) / math.sqrt(156.0)
    attn = jax.nn.softmax(scores, axis=-1)
    context = jnp.matmul(attn, v)
    return context, attn


if __name__ == "__main__":
    # Small shapes consistent with the module (sqrt(156) scale => d_k = 156).
    # bh = batch*heads = 8 is even -> balanced megacore split on v7x.
    batch, heads, seq, d_k = 2, 4, 128, 156

    key = jax.random.PRNGKey(0)
    kq, kk, kv = jax.random.split(key, 3)
    Q = jax.random.normal(kq, (batch, heads, seq, d_k), dtype=jnp.float32)
    K = jax.random.normal(kk, (batch, heads, seq, d_k), dtype=jnp.float32)
    V = jax.random.normal(kv, (batch, heads, seq, d_k), dtype=jnp.float32)

    context, attn = scaled_dot_product_attention(Q, K, V)
    jax.block_until_ready((context, attn))

    ctx_ref, attn_ref = sdpa_ref(Q, K, V)
    assert context.shape == ctx_ref.shape and attn.shape == attn_ref.shape
    # bf16 MXU operands (f32 accumulation) + approx reciprocal => ~1e-2 tolerance.
    assert jnp.allclose(attn, attn_ref, atol=2e-2, rtol=2e-2), "attn mismatch vs reference"
    assert jnp.allclose(context, ctx_ref, atol=2e-2, rtol=2e-2), "context mismatch vs reference"

    print("KERNEL_OK")
</pallas_src>

<mosaic_0001>
module attributes {stable_mosaic.version = 11 : i64} {
  func.func @_sdpa_kernel(%arg0: i32, %arg1: i32, %arg2: memref<1x128x156xf32, #tpu.memory_space<vmem>>, %arg3: memref<1x128x156xf32, #tpu.memory_space<vmem>>, %arg4: memref<1x128x156xf32, #tpu.memory_space<vmem>>, %arg5: memref<1x128x156xf32, #tpu.memory_space<vmem>>, %arg6: memref<1x128x128xf32, #tpu.memory_space<vmem>>) attributes {dimension_semantics = [#tpu.dimension_semantics<parallel>, #tpu.dimension_semantics<parallel>], iteration_bounds = array<i64: 8, 1>, scalar_prefetch = 0 : i64, scratch_operands = 0 : i64, tpu.core_type = #tpu.core_type<tc>, window_params = [{transform_indices = @transform_0, window_bounds = array<i64: 1, 128, 156>}, {transform_indices = @transform_1, window_bounds = array<i64: 1, 128, 156>}, {transform_indices = @transform_2, window_bounds = array<i64: 1, 128, 156>}, {transform_indices = @transform_3, window_bounds = array<i64: 1, 128, 156>}, {transform_indices = @transform_4, window_bounds = array<i64: 1, 128, 128>}]} {
    %c0 = arith.constant 0 : index
    %c0_0 = arith.constant 0 : index
    %c0_1 = arith.constant 0 : index
    %0 = vector.load %arg2[%c0, %c0_0, %c0_1] : memref<1x128x156xf32, #tpu.memory_space<vmem>>, vector<1x128x156xf32>
    %1 = vector.shape_cast %0 : vector<1x128x156xf32> to vector<128x156xf32>
    %cst = arith.constant 0.0800640732 : f32
    %2 = vector.broadcast %cst : f32 to vector<128x156xf32>
    %3 = arith.mulf %1, %2 : vector<128x156xf32>
    %4 = arith.truncf %3 : vector<128x156xf32> to vector<128x156xbf16>
    %c0_2 = arith.constant 0 : index
    %c0_3 = arith.constant 0 : index
    %c0_4 = arith.constant 0 : index
    %5 = vector.load %arg3[%c0_2, %c0_3, %c0_4] : memref<1x128x156xf32, #tpu.memory_space<vmem>>, vector<1x128x156xf32>
    %6 = vector.shape_cast %5 : vector<1x128x156xf32> to vector<128x156xf32>
    %7 = arith.truncf %6 : vector<128x156xf32> to vector<128x156xbf16>
    %c0_5 = arith.constant 0 : index
    %c0_6 = arith.constant 0 : index
    %c0_7 = arith.constant 0 : index
    %8 = vector.load %arg4[%c0_5, %c0_6, %c0_7] : memref<1x128x156xf32, #tpu.memory_space<vmem>>, vector<1x128x156xf32>
    %9 = vector.shape_cast %8 : vector<1x128x156xf32> to vector<128x156xf32>
    %10 = arith.truncf %9 : vector<128x156xf32> to vector<128x156xbf16>
    %cst_8 = arith.constant dense<0.000000e+00> : vector<128x128xf32>
    %11 = tpu.matmul %4, %7, %cst_8 {dimension_numbers = #tpu.dot_dimension_numbers<[1], [1], [0], [0], [0, 0, 1, 0], [], []>} : vector<128x156xbf16>, vector<128x156xbf16>, vector<128x128xf32> -> vector<128x128xf32>
    %cst_9 = arith.constant dense<0xFF800000> : vector<128xf32>
    %12 = vector.multi_reduction <maximumf>, %11, %cst_9 [1] : vector<128x128xf32> to vector<128xf32>
    %13 = vector.shape_cast %12 : vector<128xf32> to vector<128x1xf32>
    %14 = vector.broadcast %13 : vector<128x1xf32> to vector<128x128xf32>
    %15 = arith.subf %11, %14 : vector<128x128xf32>
    %16 = math.exp %15 : vector<128x128xf32>
    %cst_10 = arith.constant dense<0.000000e+00> : vector<128xf32>
    %17 = vector.multi_reduction <add>, %16, %cst_10 [1] : vector<128x128xf32> to vector<128xf32>
    %18 = vector.shape_cast %17 : vector<128xf32> to vector<128x1xf32>
    %19 = tpu.reciprocal %18 {approx = true} : vector<128x1xf32> -> vector<128x1xf32>
    %20 = vector.broadcast %19 : vector<128x1xf32> to vector<128x128xf32>
    %21 = arith.mulf %16, %20 : vector<128x128xf32>
    %c0_11 = arith.constant 0 : index
    %c0_12 = arith.constant 0 : index
    %c0_13 = arith.constant 0 : index
    %22 = vector.load %arg6[%c0_11, %c0_12, %c0_13] : memref<1x128x128xf32, #tpu.memory_space<vmem>>, vector<1x128x128xf32>
    %23 = vector.shape_cast %22 : vector<1x128x128xf32> to vector<128x128xf32>
    %24 = vector.shape_cast %21 : vector<128x128xf32> to vector<1x128x128xf32>
    tpu.vector_store %arg6[%c0_11, %c0_12, %c0_13], %24 {strides = array<i32>} : memref<1x128x128xf32, #tpu.memory_space<vmem>>, vector<1x128x128xf32>,
    %25 = arith.truncf %21 : vector<128x128xf32> to vector<128x128xbf16>
    %cst_14 = arith.constant dense<0.000000e+00> : vector<128x156xf32>
    %26 = tpu.matmul %25, %10, %cst_14 {dimension_numbers = #tpu.dot_dimension_numbers<[1], [0], [0], [1], [0, 0, 1, 1], [], []>} : vector<128x128xbf16>, vector<128x156xbf16>, vector<128x156xf32> -> vector<128x156xf32>
    %c0_15 = arith.constant 0 : index
    %c0_16 = arith.constant 0 : index
    %c0_17 = arith.constant 0 : index
    %27 = vector.load %arg5[%c0_15, %c0_16, %c0_17] : memref<1x128x156xf32, #tpu.memory_space<vmem>>, vector<1x128x156xf32>
    %28 = vector.shape_cast %27 : vector<1x128x156xf32> to vector<128x156xf32>
    %29 = vector.shape_cast %26 : vector<128x156xf32> to vector<1x128x156xf32>
    tpu.vector_store %arg5[%c0_15, %c0_16, %c0_17], %29 {strides = array<i32>} : memref<1x128x156xf32, #tpu.memory_space<vmem>>, vector<1x128x156xf32>,
    return
  }
  func.func @transform_0(%arg0: i32, %arg1: i32) -> (i32, i32, i32) {
    %c0_i32 = arith.constant 0 : i32
    %c0_i32_0 = arith.constant 0 : i32
    return %arg0, %arg1, %c0_i32 : i32, i32, i32
  }
  func.func @transform_1(%arg0: i32, %arg1: i32) -> (i32, i32, i32) {
    %c0_i32 = arith.constant 0 : i32
    %c0_i32_0 = arith.constant 0 : i32
    %c0_i32_1 = arith.constant 0 : i32
    return %arg0, %c0_i32, %c0_i32_0 : i32, i32, i32
  }
  func.func @transform_2(%arg0: i32, %arg1: i32) -> (i32, i32, i32) {
    %c0_i32 = arith.constant 0 : i32
    %c0_i32_0 = arith.constant 0 : i32
    %c0_i32_1 = arith.constant 0 : i32
    return %arg0, %c0_i32, %c0_i32_0 : i32, i32, i32
  }
  func.func @transform_3(%arg0: i32, %arg1: i32) -> (i32, i32, i32) {
    %c0_i32 = arith.constant 0 : i32
    %c0_i32_0 = arith.constant 0 : i32
    return %arg0, %arg1, %c0_i32 : i32, i32, i32
  }
  func.func @transform_4(%arg0: i32, %arg1: i32) -> (i32, i32, i32) {
    %c0_i32 = arith.constant 0 : i32
    %c0_i32_0 = arith.constant 0 : i32
    return %arg0, %arg1, %c0_i32 : i32, i32, i32
  }
}

</mosaic_0001>

<llo_original>
// kernel: tpu_custom_call.1
$region0: #{tpu_custom_call.1}
  #allocation0 [shape = 'u32[]', space=smem, size = 0x4, offset = 0x4, fixed_abs, tag = 'smem constant byte address 0x4 - core index']
  #allocation1 [shape = 'u32[144,128]{1,0:T(1,128)}', space=vmem, size = 0x12000, scoped, tag = 'internal scratch']
  %s0 = inlined_call_operand.vmem [shape: f32[8,128,156], index: 0, kind: input, shape index: {}]
  %s1 = inlined_call_operand.vmem [shape: f32[8,128,156], index: 1, kind: input, shape index: {}]
  %s2 = inlined_call_operand.vmem [shape: f32[8,128,156], index: 2, kind: input, shape index: {}]
  %s3 = inlined_call_operand.vmem [shape: f32[8,128,156], index: 3, kind: output, shape index: {0}]
  %s4 = inlined_call_operand.hbm [shape: f32[8,128,128], index: 4, kind: output, shape index: {1}]
  %5 = xla_tuple %s3, %s4
  %s6 = sld [smem:[#allocation0]]
  $region53: #{tpu_custom_call.1} parent=0
    _
  %s8 = ssub.s32 1, %s6
  %s9 = scalar_select 0, %s8, %s6
  $region1: #{tpu_custom_call.1} parent=0
    #allocation2 [shape = 'u8[131072]{0}', space=vmem, size = 0x20000, scoped, tag = 'output window, operand 1']
    #allocation3 [shape = 's32[2]{0}', space=sflag, size = 0x8, scoped, tag = 'scoped memory for tpu_custom_call.1']
    %10 = vsyncpa [#allocation3], 0
    %s11 = scalar_lea.sflag [#allocation3], 1
    %12 = vsyncpa %s11, 0
    loop: start=0, step=1, limit=10
    $region2: #{tpu_custom_call.1} parent=1 // loop_pre_header
      _
    $region3: #{tpu_custom_call.1} parent=1 // loop_header
      %s14 = sphi 0, %s18
      %p15 = scmp.ge.s32.totalorder %s14, 10
      %s21 = sphi 0, %s33
      %s22 = sphi 0, %s29
      %s23 = sphi 0, %s21
      %s24 = sphi 0, %s22
      %s25 = sphi 0, %s23
      %s26 = sphi 0, %s24
      %s38 = sphi 0, %s40
      %s41 = sphi 0, %s38
      %s42 = sphi 0, %s41
      %s58 = sphi 0, %s42
      %s64 = sphi 0, %s66
      %s67 = sphi 0, %s64
      %s68 = sphi 0, %s67
      %s84 = sphi 0, %s68
      %s90 = sphi 0, %s92
      %s93 = sphi 0, %s90
      %s94 = sphi 0, %s93
      %s110 = sphi 0, %s94
      %s118 = sphi 0, %s120
      %s121 = sphi 0, %s118
      %s122 = sphi 0, %s121
      %s138 = sphi 0, %s122
      %s146 = sphi 0, %s148
      %s149 = sphi 0, %s146
      %s150 = sphi 0, %s149
      %s166 = sphi 0, %s150
    $region4: #{tpu_custom_call.1} parent=1 // loop_header_branch
      %17 = sbr.rel (%p15) target = $region8
    $region5: #{tpu_custom_call.1} parent=1 // loop_body
      %s19 = ssub.s32 %s14, 1
      %s20 = ssub.s32 %s14, 2
      %s27 = sadd.s32 1, %s22
      %p28 = scmp.ge.s32.totalorder %s27, 1
      %s29 = scalar_select %p28, 0, %s27
      %s30 = sadd.s32 1, %s21
      %s31 = scalar_select %p28, %s30, %s21
      %p32 = scmp.ge.s32.totalorder %s31, 8
      %s33 = scalar_select %p32, 0, %s31
      %s34 = ssub.s32 %s21, %s33
      %s35 = ssub.s32 %s22, %s29
      %s36 = sor.u32 %s34, %s35
      %p37 = scmp.eq.s32.totalorder %s36, 0
      %s39 = sadd.s32 %s38, 1
      %s40 = scalar_select %p37, %s38, %s39
      %p43 = pneg %p37
      %p44 = scmp.eq.s32.totalorder %s14, 7
      %p45 = por %p43, %p44
      %p46 = scmp.ne.s32.totalorder %s38, %s41
      %p47 = scmp.eq.s32.totalorder %s14, 0
      %p48 = por %p46, %p47
      %p49 = scmp.ne.s32.totalorder %s38, %s41
      %p50 = scmp.eq.s32.totalorder %s19, 7
      %p51 = por %p49, %p50
      %p52 = scmp.ne.s32.totalorder %s41, %s42
      %p53 = scmp.eq.s32.totalorder %s19, 0
      %p54 = por %p52, %p53
      %p55 = scmp.ne.s32.totalorder %s41, %s42
      %p56 = scmp.eq.s32.totalorder %s20, 7
      %p57 = por %p55, %p56
      %p59 = scmp.ne.s32.totalorder %s42, %s58
      %p60 = scmp.eq.s32.totalorder %s20, 0
      %p61 = por %p59, %p60
      %s62 = ssub.s32 %s21, %s33
      %p63 = scmp.eq.s32.totalorder %s62, 0
      %s65 = sadd.s32 %s64, 1
      %s66 = scalar_select %p63, %s64, %s65
      %p69 = pneg %p63
      %p70 = scmp.eq.s32.totalorder %s14, 7
      %p71 = por %p69, %p70
      %p72 = scmp.ne.s32.totalorder %s64, %s67
      %p73 = scmp.eq.s32.totalorder %s14, 0
      %p74 = por %p72, %p73
      %p75 = scmp.ne.s32.totalorder %s64, %s67
      %p76 = scmp.eq.s32.totalorder %s19, 7
      %p77 = por %p75, %p76
      %p78 = scmp.ne.s32.totalorder %s67, %s68
      %p79 = scmp.eq.s32.totalorder %s19, 0
      %p80 = por %p78, %p79
      %p81 = scmp.ne.s32.totalorder %s67, %s68
      %p82 = scmp.eq.s32.totalorder %s20, 7
      %p83 = por %p81, %p82
      %p85 = scmp.ne.s32.totalorder %s68, %s84
      %p86 = scmp.eq.s32.totalorder %s20, 0
      %p87 = por %p85, %p86
      %s88 = ssub.s32 %s21, %s33
      %p89 = scmp.eq.s32.totalorder %s88, 0
      %s91 = sadd.s32 %s90, 1
      %s92 = scalar_select %p89, %s90, %s91
      %p95 = pneg %p89
      %p96 = scmp.eq.s32.totalorder %s14, 7
      %p97 = por %p95, %p96
      %p98 = scmp.ne.s32.totalorder %s90, %s93
      %p99 = scmp.eq.s32.totalorder %s14, 0
      %p100 = por %p98, %p99
      %p101 = scmp.ne.s32.totalorder %s90, %s93
      %p102 = scmp.eq.s32.totalorder %s19, 7
      %p103 = por %p101, %p102
      %p104 = scmp.ne.s32.totalorder %s93, %s94
      %p105 = scmp.eq.s32.totalorder %s19, 0
      %p106 = por %p104, %p105
      %p107 = scmp.ne.s32.totalorder %s93, %s94
      %p108 = scmp.eq.s32.totalorder %s20, 7
      %p109 = por %p107, %p108
      %p111 = scmp.ne.s32.totalorder %s94, %s110
      %p112 = scmp.eq.s32.totalorder %s20, 0
      %p113 = por %p111, %p112
      %s114 = ssub.s32 %s21, %s33
      %s115 = ssub.s32 %s22, %s29
      %s116 = sor.u32 %s114, %s115
      %p117 = scmp.eq.s32.totalorder %s116, 0
      %s119 = sadd.s32 %s118, 1
      %s120 = scalar_select %p117, %s118, %s119
      %p123 = pneg %p117
      %p124 = scmp.eq.s32.totalorder %s14, 7
      %p125 = por %p123, %p124
      %p126 = scmp.ne.s32.totalorder %s118, %s121
      %p127 = scmp.eq.s32.totalorder %s14, 0
      %p128 = por %p126, %p127
      %p129 = scmp.ne.s32.totalorder %s118, %s121
      %p130 = scmp.eq.s32.totalorder %s19, 7
      %p131 = por %p129, %p130
      %p132 = scmp.ne.s32.totalorder %s121, %s122
      %p133 = scmp.eq.s32.totalorder %s19, 0
      %p134 = por %p132, %p133
      %p135 = scmp.ne.s32.totalorder %s121, %s122
      %p136 = scmp.eq.s32.totalorder %s20, 7
      %p137 = por %p135, %p136
      %p139 = scmp.ne.s32.totalorder %s122, %s138
      %p140 = scmp.eq.s32.totalorder %s20, 0
      %p141 = por %p139, %p140
      %s142 = ssub.s32 %s21, %s33
      %s143 = ssub.s32 %s22, %s29
      %s144 = sor.u32 %s142, %s143
      %p145 = scmp.eq.s32.totalorder %s144, 0
      %s147 = sadd.s32 %s146, 1
      %s148 = scalar_select %p145, %s146, %s147
      %p151 = pneg %p145
      %p152 = scmp.eq.s32.totalorder %s14, 7
      %p153 = por %p151, %p152
      %p154 = scmp.ne.s32.totalorder %s146, %s149
      %p155 = scmp.eq.s32.totalorder %s14, 0
      %p156 = por %p154, %p155
      %p157 = scmp.ne.s32.totalorder %s146, %s149
      %p158 = scmp.eq.s32.totalorder %s19, 7
      %p159 = por %p157, %p158
      %p160 = scmp.ne.s32.totalorder %s149, %s150
      %p161 = scmp.eq.s32.totalorder %s19, 0
      %p162 = por %p160, %p161
      %p163 = scmp.ne.s32.totalorder %s149, %s150
      %p164 = scmp.eq.s32.totalorder %s20, 7
      %p165 = por %p163, %p164
      %p167 = scmp.ne.s32.totalorder %s150, %s166
      %p168 = scmp.eq.s32.totalorder %s20, 0
      %p169 = por %p167, %p168
      %p170 = scmp.le.s32.totalorder 1, %s14
      %p171 = scmp.lt.s32.totalorder %s14, 9
      %p172 = pnand %p170, %p171
      %p173 = pneg %p172
      // Predicated region
      $region9: #{tpu_custom_call.1} parent=5 // pred_check
        _
      $region10: #{tpu_custom_call.1} parent=5 // pred_check_branch
        %175 = sbr.rel (%p172) target = $region12
      $region11: #{tpu_custom_call.1} parent=5 // pred_region
        %s176 = ssub.s32 %s14, 1
      $region12: #{tpu_custom_call.1} parent=5 // pred_fallthru
        _
      %p177 = scmp.lt.s32.totalorder %s14, 8
      // Predicated region
      $region13: #{tpu_custom_call.1} parent=5 // pred_check
        %p178 = pneg %p177
      $region14: #{tpu_custom_call.1} parent=5 // pred_check_branch
        %180 = sbr.rel (%p178) target = $region16
      $region15: #{tpu_custom_call.1} parent=5 // pred_region
        // Predicated region
        $region17: #{tpu_custom_call.1} parent=15 // pred_check
          %p181 = pneg %p48
        $region18: #{tpu_custom_call.1} parent=15 // pred_check_branch
          %183 = sbr.rel (%p181) target = $region20
        $region19: #{tpu_custom_call.1} parent=15 // pred_region
          %s184 = smul.u32 16, %s22
          %p185 = scmp.lt.s32.totalorder %s21, 7
          %s186 = scalar_select %p185, %s21, 7
          %p187 = scmp.lt.s32.totalorder %s184, 15
          %s188 = scalar_select %p187, %s184, 15
          %s189 = smul.addr %s188, 2
          %s190 = smul.addr %s186, 32
          %s191 = sadd.s32 %s189, %s190
          %s192 = smul.addr %s191, 8
          %s193 = scalar_lea.vmem %s0, %s192
          %s194 = smul.u32 16, %s22
        $region20: #{tpu_custom_call.1} parent=15 // pred_fallthru
          _
        // Predicated region
        $region21: #{tpu_custom_call.1} parent=15 // pred_check
          %p195 = pneg %p74
        $region22: #{tpu_custom_call.1} parent=15 // pred_check_branch
          %197 = sbr.rel (%p195) target = $region24
        $region23: #{tpu_custom_call.1} parent=15 // pred_region
          %p198 = scmp.lt.s32.totalorder %s21, 7
          %s199 = scalar_select %p198, %s21, 7
          %s200 = smul.addr %s199, 32
          %s201 = smul.addr %s200, 8
          %s202 = scalar_lea.vmem %s1, %s201
        $region24: #{tpu_custom_call.1} parent=15 // pred_fallthru
          _
        // Predicated region
        $region25: #{tpu_custom_call.1} parent=15 // pred_check
          %p203 = pneg %p100
        $region26: #{tpu_custom_call.1} parent=15 // pred_check_branch
          %205 = sbr.rel (%p203) target = $region28
        $region27: #{tpu_custom_call.1} parent=15 // pred_region
          %p206 = scmp.lt.s32.totalorder %s21, 7
          %s207 = scalar_select %p206, %s21, 7
          %s208 = smul.addr %s207, 32
          %s209 = smul.addr %s208, 8
          %s210 = scalar_lea.vmem %s2, %s209
        $region28: #{tpu_custom_call.1} parent=15 // pred_fallthru
          _
      $region16: #{tpu_custom_call.1} parent=5 // pred_fallthru
        _
      %p211 = scmp.le.s32.totalorder 1, %s14
      %p212 = scmp.lt.s32.totalorder %s14, 9
      %p213 = pnand %p211, %p212
      %p214 = pneg %p213
      // Predicated region
      $region29: #{tpu_custom_call.1} parent=5 // pred_check
        _
      $region30: #{tpu_custom_call.1} parent=5 // pred_check_branch
        %216 = sbr.rel (%p213) target = $region32
      $region31: #{tpu_custom_call.1} parent=5 // pred_region
        %s217 = ssub.s32 %s14, 1
        %s218 = smul.u32 16, %s24
        %p219 = scmp.lt.s32.totalorder %s23, 7
        %s220 = scalar_select %p219, %s23, 7
        %p221 = scmp.lt.s32.totalorder %s218, 15
        %s222 = scalar_select %p221, %s218, 15
        %s223 = smul.addr %s222, 2
        %s224 = smul.addr %s220, 32
        %s225 = sadd.s32 %s223, %s224
        %s226 = smul.addr %s225, 8
        %s227 = scalar_lea.vmem %s0, %s226
        %p228 = pneg %p54
        %p229 = pneg %p51
        %p230 = scmp.lt.s32.totalorder %s23, 7
        %s231 = scalar_select %p230, %s23, 7
        %s232 = smul.addr %s231, 32
        %s233 = smul.addr %s232, 8
        %s234 = scalar_lea.vmem %s1, %s233
        %p235 = pneg %p80
        %p236 = pneg %p77
        %p237 = scmp.lt.s32.totalorder %s23, 7
        %s238 = scalar_select %p237, %s23, 7
        %s239 = smul.addr %s238, 32
        %s240 = smul.addr %s239, 8
        %s241 = scalar_lea.vmem %s2, %s240
        %p242 = pneg %p106
        %p243 = pneg %p103
        %p244 = pneg %p134
        %p245 = pneg %p131
        %s246 = smul.u32 16, %s24
        %p247 = scmp.lt.s32.totalorder %s23, 7
        %s248 = scalar_select %p247, %s23, 7
        %p249 = scmp.lt.s32.totalorder %s246, 15
        %s250 = scalar_select %p249, %s246, 15
        %s251 = smul.addr %s250, 2
        %s252 = smul.addr %s248, 32
        %s253 = sadd.s32 %s251, %s252
        %s254 = smul.addr %s253, 8
        %s255 = scalar_lea.vmem %s3, %s254
        %p256 = pneg %p162
        %p257 = pneg %p159
        %s258 = sand.u32 %s149, 1
        %s259 = scalar_lea.sflag [#allocation3], %s258
        %s260 = sand.u32 %s149, 1
        %s261 = smul.addr %s260, 128
        %s262 = scalar_lea.vmem [#allocation2], %s261
        %s263 = smul.u32 16, %s24
        %p264 = scmp.lt.s32.totalorder %s23, 7
        %s265 = scalar_select %p264, %s23, 7
        %p266 = scmp.lt.s32.totalorder %s263, 15
        %s267 = scalar_select %p266, %s263, 15
        %s268 = smul.addr %s267, 2
        %s269 = smul.addr %s265, 32
        %s270 = sadd.s32 %s268, %s269
        %s271 = smul.addr %s270, 8
        %s272 = scalar_lea.vmem %s0, %s271
        %s273 = smul.u32 16, %s24
        %p274 = scmp.lt.s32.totalorder %s23, 7
        %s275 = scalar_select %p274, %s23, 7
        %s276 = smul.addr %s275, 32
        %s277 = smul.addr %s276, 8
        %s278 = scalar_lea.vmem %s1, %s277
        %p279 = scmp.lt.s32.totalorder %s23, 7
        %s280 = scalar_select %p279, %s23, 7
        %s281 = smul.addr %s280, 32
        %s282 = smul.addr %s281, 8
        %s283 = scalar_lea.vmem %s2, %s282
        %s284 = smul.u32 16, %s24
        %p285 = scmp.lt.s32.totalorder %s23, 7
        %s286 = scalar_select %p285, %s23, 7
        %p287 = scmp.lt.s32.totalorder %s284, 15
        %s288 = scalar_select %p287, %s284, 15
        %s289 = smul.addr %s288, 2
        %s290 = smul.addr %s286, 32
        %s291 = sadd.s32 %s289, %s290
        %s292 = smul.addr %s291, 8
        %s293 = scalar_lea.vmem %s3, %s292
        %s294 = smul.u32 16, %s24
        %s295 = smul.u32 16, %s24
        %v297 = vld [vmem:[%s272] sm:$0xff]
        %v298 = vld [vmem:[%s272 + $0x8] sm:$0xff]
        %v299 = vld [vmem:[%s272 + $0x10] sm:$0xff]
        %v300 = vld [vmem:[%s272 + $0x18] sm:$0xff]
        %v301 = vld [vmem:[%s272 + $0x20] sm:$0xff]
        %v302 = vld [vmem:[%s272 + $0x28] sm:$0xff]
        %v303 = vld [vmem:[%s272 + $0x30] sm:$0xff]
        %v304 = vld [vmem:[%s272 + $0x38] sm:$0xff]
        %v305 = vld [vmem:[%s272 + $0x40] sm:$0xff]
        %v306 = vld [vmem:[%s272 + $0x48] sm:$0xff]
        %v307 = vld [vmem:[%s272 + $0x50] sm:$0xff]
        %v308 = vld [vmem:[%s272 + $0x58] sm:$0xff]
        %v309 = vld [vmem:[%s272 + $0x60] sm:$0xff]
        %v310 = vld [vmem:[%s272 + $0x68] sm:$0xff]
        %v311 = vld [vmem:[%s272 + $0x70] sm:$0xff]
        %v312 = vld [vmem:[%s272 + $0x78] sm:$0xff]
        %v313 = vld [vmem:[%s272 + $0x80] sm:$0xff]
        %v314 = vld [vmem:[%s272 + $0x88] sm:$0xff]
        %v315 = vld [vmem:[%s272 + $0x90] sm:$0xff]
        %v316 = vld [vmem:[%s272 + $0x98] sm:$0xff]
        %v317 = vld [vmem:[%s272 + $0xa0] sm:$0xff]
        %v318 = vld [vmem:[%s272 + $0xa8] sm:$0xff]
        %v319 = vld [vmem:[%s272 + $0xb0] sm:$0xff]
        %v320 = vld [vmem:[%s272 + $0xb8] sm:$0xff]
        %v321 = vld [vmem:[%s272 + $0xc0] sm:$0xff]
        %v322 = vld [vmem:[%s272 + $0xc8] sm:$0xff]
        %v323 = vld [vmem:[%s272 + $0xd0] sm:$0xff]
        %v324 = vld [vmem:[%s272 + $0xd8] sm:$0xff]
        %v325 = vld [vmem:[%s272 + $0xe0] sm:$0xff]
        %v326 = vld [vmem:[%s272 + $0xe8] sm:$0xff]
        %v327 = vld [vmem:[%s272 + $0xf0] sm:$0xff]
        %v328 = vld [vmem:[%s272 + $0xf8] sm:$0xff]
        %v329 = vmul.f32 %v297, 0.08006407
        %v330 = vmul.f32 %v298, 0.08006407
        %v331 = vmul.f32 %v299, 0.08006407
        %v332 = vmul.f32 %v300, 0.08006407
        %v333 = vmul.f32 %v301, 0.08006407
        %v334 = vmul.f32 %v302, 0.08006407
        %v335 = vmul.f32 %v303, 0.08006407
        %v336 = vmul.f32 %v304, 0.08006407
        %v337 = vmul.f32 %v305, 0.08006407
        %v338 = vmul.f32 %v306, 0.08006407
        %v339 = vmul.f32 %v307, 0.08006407
        %v340 = vmul.f32 %v308, 0.08006407
        %v341 = vmul.f32 %v309, 0.08006407
        %v342 = vmul.f32 %v310, 0.08006407
        %v343 = vmul.f32 %v311, 0.08006407
        %v344 = vmul.f32 %v312, 0.08006407
        %v345 = vmul.f32 %v313, 0.08006407
        %v346 = vmul.f32 %v314, 0.08006407
        %v347 = vmul.f32 %v315, 0.08006407
        %v348 = vmul.f32 %v316, 0.08006407
        %v349 = vmul.f32 %v317, 0.08006407
        %v350 = vmul.f32 %v318, 0.08006407
        %v351 = vmul.f32 %v319, 0.08006407
        %v352 = vmul.f32 %v320, 0.08006407
        %v353 = vmul.f32 %v321, 0.08006407
        %v354 = vmul.f32 %v322, 0.08006407
        %v355 = vmul.f32 %v323, 0.08006407
        %v356 = vmul.f32 %v324, 0.08006407
        %v357 = vmul.f32 %v325, 0.08006407
        %v358 = vmul.f32 %v326, 0.08006407
        %v359 = vmul.f32 %v327, 0.08006407
        %v360 = vmul.f32 %v328, 0.08006407
        %v361 = vpack.c.bf16 %v331, %v329
        %v362 = vpack.c.bf16 %v332, %v330
        %v363 = vpack.c.bf16 %v335, %v333
        %v364 = vpack.c.bf16 %v336, %v334
        %v365 = vpack.c.bf16 %v339, %v337
        %v366 = vpack.c.bf16 %v340, %v338
        %v367 = vpack.c.bf16 %v343, %v341
        %v368 = vpack.c.bf16 %v344, %v342
        %v369 = vpack.c.bf16 %v347, %v345
        %v370 = vpack.c.bf16 %v348, %v346
        %v371 = vpack.c.bf16 %v351, %v349
        %v372 = vpack.c.bf16 %v352, %v350
        %v373 = vpack.c.bf16 %v355, %v353
        %v374 = vpack.c.bf16 %v356, %v354
        %v375 = vpack.c.bf16 %v359, %v357
        %v376 = vpack.c.bf16 %v360, %v358
        %v377 = vld [vmem:[%s278] sm:$0xff]
        %v378 = vld [vmem:[%s278 + $0x8] sm:$0xff]
        %v379 = vld [vmem:[%s278 + $0x10] sm:$0xff]
        %v380 = vld [vmem:[%s278 + $0x18] sm:$0xff]
        %v381 = vld [vmem:[%s278 + $0x20] sm:$0xff]
        %v382 = vld [vmem:[%s278 + $0x28] sm:$0xff]
        %v383 = vld [vmem:[%s278 + $0x30] sm:$0xff]
        %v384 = vld [vmem:[%s278 + $0x38] sm:$0xff]
        %v385 = vld [vmem:[%s278 + $0x40] sm:$0xff]
        %v386 = vld [vmem:[%s278 + $0x48] sm:$0xff]
        %v387 = vld [vmem:[%s278 + $0x50] sm:$0xff]
        %v388 = vld [vmem:[%s278 + $0x58] sm:$0xff]
        %v389 = vld [vmem:[%s278 + $0x60] sm:$0xff]
        %v390 = vld [vmem:[%s278 + $0x68] sm:$0xff]
        %v391 = vld [vmem:[%s278 + $0x70] sm:$0xff]
        %v392 = vld [vmem:[%s278 + $0x78] sm:$0xff]
        %v393 = vld [vmem:[%s278 + $0x80] sm:$0xff]
        %v394 = vld [vmem:[%s278 + $0x88] sm:$0xff]
        %v395 = vld [vmem:[%s278 + $0x90] sm:$0xff]
        %v396 = vld [vmem:[%s278 + $0x98] sm:$0xff]
        %v397 = vld [vmem:[%s278 + $0xa0] sm:$0xff]
        %v398 = vld [vmem:[%s278 + $0xa8] sm:$0xff]
        %v399 = vld [vmem:[%s278 + $0xb0] sm:$0xff]
        %v400 = vld [vmem:[%s278 + $0xb8] sm:$0xff]
        %v401 = vld [vmem:[%s278 + $0xc0] sm:$0xff]
        %v402 = vld [vmem:[%s278 + $0xc8] sm:$0xff]
        %v403 = vld [vmem:[%s278 + $0xd0] sm:$0xff]
        %v404 = vld [vmem:[%s278 + $0xd8] sm:$0xff]
        %v405 = vld [vmem:[%s278 + $0xe0] sm:$0xff]
        %v406 = vld [vmem:[%s278 + $0xe8] sm:$0xff]
        %v407 = vld [vmem:[%s278 + $0xf0] sm:$0xff]
        %v408 = vld [vmem:[%s278 + $0xf8] sm:$0xff]
        %v409 = vpack.c.bf16 %v379, %v377
        %v410 = vpack.c.bf16 %v380, %v378
        %v411 = vpack.c.bf16 %v383, %v381
        %v412 = vpack.c.bf16 %v384, %v382
        %v413 = vpack.c.bf16 %v387, %v385
        %v414 = vpack.c.bf16 %v388, %v386
        %v415 = vpack.c.bf16 %v391, %v389
        %v416 = vpack.c.bf16 %v392, %v390
        %v417 = vpack.c.bf16 %v395, %v393
        %v418 = vpack.c.bf16 %v396, %v394
        %v419 = vpack.c.bf16 %v399, %v397
        %v420 = vpack.c.bf16 %v400, %v398
        %v421 = vpack.c.bf16 %v403, %v401
        %v422 = vpack.c.bf16 %v404, %v402
        %v423 = vpack.c.bf16 %v407, %v405
        %v424 = vpack.c.bf16 %v408, %v406
        %v425 = vld [vmem:[%s283] sm:$0xff]
        %v426 = vld [vmem:[%s283 + $0x8] sm:$0xff]
        %v427 = vld [vmem:[%s283 + $0x10] sm:$0xff]
        %v428 = vld [vmem:[%s283 + $0x18] sm:$0xff]
        %v429 = vld [vmem:[%s283 + $0x20] sm:$0xff]
        %v430 = vld [vmem:[%s283 + $0x28] sm:$0xff]
        %v431 = vld [vmem:[%s283 + $0x30] sm:$0xff]
        %v432 = vld [vmem:[%s283 + $0x38] sm:$0xff]
        %v433 = vld [vmem:[%s283 + $0x40] sm:$0xff]
        %v434 = vld [vmem:[%s283 + $0x48] sm:$0xff]
        %v435 = vld [vmem:[%s283 + $0x50] sm:$0xff]
        %v436 = vld [vmem:[%s283 + $0x58] sm:$0xff]
        %v437 = vld [vmem:[%s283 + $0x60] sm:$0xff]
        %v438 = vld [vmem:[%s283 + $0x68] sm:$0xff]
        %v439 = vld [vmem:[%s283 + $0x70] sm:$0xff]
        %v440 = vld [vmem:[%s283 + $0x78] sm:$0xff]
        %v441 = vld [vmem:[%s283 + $0x80] sm:$0xff]
        %v442 = vld [vmem:[%s283 + $0x88] sm:$0xff]
        %v443 = vld [vmem:[%s283 + $0x90] sm:$0xff]
        %v444 = vld [vmem:[%s283 + $0x98] sm:$0xff]
        %v445 = vld [vmem:[%s283 + $0xa0] sm:$0xff]
        %v446 = vld [vmem:[%s283 + $0xa8] sm:$0xff]
        %v447 = vld [vmem:[%s283 + $0xb0] sm:$0xff]
        %v448 = vld [vmem:[%s283 + $0xb8] sm:$0xff]
        %v449 = vld [vmem:[%s283 + $0xc0] sm:$0xff]
        %v450 = vld [vmem:[%s283 + $0xc8] sm:$0xff]
        %v451 = vld [vmem:[%s283 + $0xd0] sm:$0xff]
        %v452 = vld [vmem:[%s283 + $0xd8] sm:$0xff]
        %v453 = vld [vmem:[%s283 + $0xe0] sm:$0xff]
        %v454 = vld [vmem:[%s283 + $0xe8] sm:$0xff]
        %v455 = vld [vmem:[%s283 + $0xf0] sm:$0xff]
        %v456 = vld [vmem:[%s283 + $0xf8] sm:$0xff]
        %v457 = vpack.c.bf16 %v427, %v425
        %v458 = vpack.c.bf16 %v428, %v426
        %v459 = vpack.c.bf16 %v431, %v429
        %v460 = vpack.c.bf16 %v432, %v430
        %v461 = vpack.c.bf16 %v435, %v433
        %v462 = vpack.c.bf16 %v436, %v434
        %v463 = vpack.c.bf16 %v439, %v437
        %v464 = vpack.c.bf16 %v440, %v438
        %v465 = vpack.c.bf16 %v443, %v441
        %v466 = vpack.c.bf16 %v444, %v442
        %v467 = vpack.c.bf16 %v447, %v445
        %v468 = vpack.c.bf16 %v448, %v446
        %v469 = vpack.c.bf16 %v451, %v449
        %v470 = vpack.c.bf16 %v452, %v450
        %v471 = vpack.c.bf16 %v455, %v453
        %v472 = vpack.c.bf16 %v456, %v454
        %vm473 = vcmask 228352
        %v475 = vsel %vm473, %v362, 0
        %v478 = vsel %vm473, %v364, 0
        %v481 = vsel %vm473, %v366, 0
        %v484 = vsel %vm473, %v368, 0
        %v487 = vsel %vm473, %v370, 0
        %v490 = vsel %vm473, %v372, 0
        %v493 = vsel %vm473, %v374, 0
        %v496 = vsel %vm473, %v376, 0
        %v499 = vsel %vm473, %v410, 0
        %v502 = vsel %vm473, %v412, 0
        %v505 = vsel %vm473, %v414, 0
        %v508 = vsel %vm473, %v416, 0
        %v511 = vsel %vm473, %v418, 0
        %v514 = vsel %vm473, %v420, 0
        %v517 = vsel %vm473, %v422, 0
        %v520 = vsel %vm473, %v424, 0
        %522 = vmatprep.subr.bf16.mxu0 %v520
        %523 = vmatpush1.bf16.xpose.msra.mxu0 %v423
        %524 = vmatprep.subr.bf16.mxu0 %v517
        %525 = vmatpush1.bf16.xpose.msra.mxu0 %v421
        %526 = vmatprep.subr.bf16.mxu0 %v514
        %527 = vmatpush1.bf16.xpose.msra.mxu0 %v419
        %528 = vmatprep.subr.bf16.mxu0 %v511
        %529 = vmatpush1.bf16.xpose.msra.mxu0 %v417
        %530 = vmatprep.subr.bf16.mxu0 %v508
        %531 = vmatpush1.bf16.xpose.msra.mxu0 %v415
        %532 = vmatprep.subr.bf16.mxu0 %v505
        %533 = vmatpush1.bf16.xpose.msra.mxu0 %v413
        %534 = vmatprep.subr.bf16.mxu0 %v502
        %535 = vmatpush1.bf16.xpose.msra.mxu0 %v411
        %536 = vmatprep.subr.bf16.mxu0 %v499
        %537 = vmatpush1.bf16.xpose.msra.mxu0 %v409
        %538 = vmatprep.subr.bf16.mxu0 0
        %539 = vmatpush2.bf16.xpose.msra.mxu0 0
        %540 = vmatprep.subr.bf16.mxu0 0
        %541 = vmatpush2.bf16.xpose.msra.mxu0 0
        %542 = vmatprep.subr.bf16.mxu0 0
        %543 = vmatpush2.bf16.xpose.msra.mxu0 0
        %544 = vmatprep.subr.bf16.mxu0 0
        %545 = vmatpush2.bf16.xpose.msra.mxu0 0
        %546 = vmatprep.subr.bf16.mxu0 0
        %547 = vmatpush2.bf16.xpose.msra.mxu0 0
        %548 = vmatprep.subr.bf16.mxu0 0
        %549 = vmatpush2.bf16.xpose.msra.mxu0 0
        %550 = vmatprep.subr.bf16.mxu0 0
        %551 = vmatpush2.bf16.xpose.msra.mxu0 0
        %552 = vmatprep.subr.bf16.mxu0 0
        %553 = vmatpush2.bf16.xpose.msra.mxu0 0
        %554 = vmatprep.mubr.bf16.mxu0 %v475
        %555 = vmatmul.mubr.bf16.gmra.mxu0 %v361
        %v556 = vpop.f32.mrf.mxu0
        %v557 = vadd.f32 0.0, %v556
        %v558 = vpop.f32.mrf.mxu0
        %v559 = vpop.f32.mrf.mxu0
        %v560 = vadd.f32 0.0, %v559
        %v561 = vpop.f32.mrf.mxu0
        %562 = vmatprep.mubr.bf16.mxu0 %v478
        %563 = vmatmul.mubr.bf16.gmra.mxu0 %v363
        %v564 = vpop.f32.mrf.mxu0
        %v565 = vadd.f32 0.0, %v564
        %v566 = vpop.f32.mrf.mxu0
        %v567 = vpop.f32.mrf.mxu0
        %v568 = vadd.f32 0.0, %v567
        %v569 = vpop.f32.mrf.mxu0
        %570 = vmatprep.mubr.bf16.mxu0 %v481
        %571 = vmatmul.mubr.bf16.gmra.mxu0 %v365
        %v572 = vpop.f32.mrf.mxu0
        %v573 = vadd.f32 0.0, %v572
        %v574 = vpop.f32.mrf.mxu0
        %v575 = vpop.f32.mrf.mxu0
        %v576 = vadd.f32 0.0, %v575
        %v577 = vpop.f32.mrf.mxu0
        %578 = vmatprep.mubr.bf16.mxu0 %v484
        %579 = vmatmul.mubr.bf16.gmra.mxu0 %v367
        %v580 = vpop.f32.mrf.mxu0
        %v581 = vadd.f32 0.0, %v580
        %v582 = vpop.f32.mrf.mxu0
        %v583 = vpop.f32.mrf.mxu0
        %v584 = vadd.f32 0.0, %v583
        %v585 = vpop.f32.mrf.mxu0
        %586 = vmatprep.mubr.bf16.mxu0 %v487
        %587 = vmatmul.mubr.bf16.gmra.mxu0 %v369
        %v588 = vpop.f32.mrf.mxu0
        %v589 = vadd.f32 0.0, %v588
        %v590 = vpop.f32.mrf.mxu0
        %v591 = vpop.f32.mrf.mxu0
        %v592 = vadd.f32 0.0, %v591
        %v593 = vpop.f32.mrf.mxu0
        %594 = vmatprep.mubr.bf16.mxu0 %v490
        %595 = vmatmul.mubr.bf16.gmra.mxu0 %v371
        %v596 = vpop.f32.mrf.mxu0
        %v597 = vadd.f32 0.0, %v596
        %v598 = vpop.f32.mrf.mxu0
        %v599 = vpop.f32.mrf.mxu0
        %v600 = vadd.f32 0.0, %v599
        %v601 = vpop.f32.mrf.mxu0
        %602 = vmatprep.mubr.bf16.mxu0 %v493
        %603 = vmatmul.mubr.bf16.gmra.mxu0 %v373
        %v604 = vpop.f32.mrf.mxu0
        %v605 = vadd.f32 0.0, %v604
        %v606 = vpop.f32.mrf.mxu0
        %v607 = vpop.f32.mrf.mxu0
        %v608 = vadd.f32 0.0, %v607
        %v609 = vpop.f32.mrf.mxu0
        %610 = vmatprep.mubr.bf16.mxu0 %v496
        %611 = vmatmul.mubr.bf16.gmra.mxu0 %v375
        %v612 = vpop.f32.mrf.mxu0
        %v613 = vadd.f32 0.0, %v612
        %v614 = vpop.f32.mrf.mxu0
        %v615 = vpop.f32.mrf.mxu0
        %v616 = vadd.f32 0.0, %v615
        %v617 = vpop.f32.mrf.mxu0
        %618 = vdwg.mxu0
        %619 = vmax.xlane.f32.xlu0 %v557
        %v620 = vpop.xlane.xlu0 %619
        %621 = vmax.xlane.f32.xlu0 %v560
        %v622 = vpop.xlane.xlu0 %621
        %623 = vmax.xlane.f32.xlu0 %v565
        %v624 = vpop.xlane.xlu0 %623
        %625 = vmax.xlane.f32.xlu0 %v568
        %v626 = vpop.xlane.xlu0 %625
        %627 = vmax.xlane.f32.xlu0 %v573
        %v628 = vpop.xlane.xlu0 %627
        %629 = vmax.xlane.f32.xlu0 %v576
        %v630 = vpop.xlane.xlu0 %629
        %631 = vmax.xlane.f32.xlu0 %v581
        %v632 = vpop.xlane.xlu0 %631
        %633 = vmax.xlane.f32.xlu0 %v584
        %v634 = vpop.xlane.xlu0 %633
        %635 = vmax.xlane.f32.xlu0 %v589
        %v636 = vpop.xlane.xlu0 %635
        %637 = vmax.xlane.f32.xlu0 %v592
        %v638 = vpop.xlane.xlu0 %637
        %639 = vmax.xlane.f32.xlu0 %v597
        %v640 = vpop.xlane.xlu0 %639
        %641 = vmax.xlane.f32.xlu0 %v600
        %v642 = vpop.xlane.xlu0 %641
        %643 = vmax.xlane.f32.xlu0 %v605
        %v644 = vpop.xlane.xlu0 %643
        %645 = vmax.xlane.f32.xlu0 %v608
        %v646 = vpop.xlane.xlu0 %645
        %647 = vmax.xlane.f32.xlu0 %v613
        %v648 = vpop.xlane.xlu0 %647
        %649 = vmax.xlane.f32.xlu0 %v616
        %v650 = vpop.xlane.xlu0 %649
        %v651 = vsub.f32 %v557, %v620
        %v652 = vsub.f32 %v560, %v622
        %v653 = vsub.f32 %v565, %v624
        %v654 = vsub.f32 %v568, %v626
        %v655 = vsub.f32 %v573, %v628
        %v656 = vsub.f32 %v576, %v630
        %v657 = vsub.f32 %v581, %v632
        %v658 = vsub.f32 %v584, %v634
        %v659 = vsub.f32 %v589, %v636
        %v660 = vsub.f32 %v592, %v638
        %v661 = vsub.f32 %v597, %v640
        %v662 = vsub.f32 %v600, %v642
        %v663 = vsub.f32 %v605, %v644
        %v664 = vsub.f32 %v608, %v646
        %v665 = vsub.f32 %v613, %v648
        %v666 = vsub.f32 %v616, %v650
        %v667 = vmul.f32 %v651, 1.442695
        %v668 = vpow.pop %v667
        %v669 = vmul.f32 %v652, 1.442695
        %v670 = vpow.pop %v669
        %v671 = vmul.f32 %v653, 1.442695
        %v672 = vpow.pop %v671
        %v673 = vmul.f32 %v654, 1.442695
        %v674 = vpow.pop %v673
        %v675 = vmul.f32 %v655, 1.442695
        %v676 = vpow.pop %v675
        %v677 = vmul.f32 %v656, 1.442695
        %v678 = vpow.pop %v677
        %v679 = vmul.f32 %v657, 1.442695
        %v680 = vpow.pop %v679
        %v681 = vmul.f32 %v658, 1.442695
        %v682 = vpow.pop %v681
        %v683 = vmul.f32 %v659, 1.442695
        %v684 = vpow.pop %v683
        %v685 = vmul.f32 %v660, 1.442695
        %v686 = vpow.pop %v685
        %v687 = vmul.f32 %v661, 1.442695
        %v688 = vpow.pop %v687
        %v689 = vmul.f32 %v662, 1.442695
        %v690 = vpow.pop %v689
        %v691 = vmul.f32 %v663, 1.442695
        %v692 = vpow.pop %v691
        %v693 = vmul.f32 %v664, 1.442695
        %v694 = vpow.pop %v693
        %v695 = vmul.f32 %v665, 1.442695
        %v696 = vpow.pop %v695
        %v697 = vmul.f32 %v666, 1.442695
        %v698 = vpow.pop %v697
        %699 = vadd.xlane.f32.xlu0 %v668
        %v700 = vpop.xlane.xlu0 %699
        %701 = vadd.xlane.f32.xlu0 %v670
        %v702 = vpop.xlane.xlu0 %701
        %703 = vadd.xlane.f32.xlu0 %v672
        %v704 = vpop.xlane.xlu0 %703
        %705 = vadd.xlane.f32.xlu0 %v674
        %v706 = vpop.xlane.xlu0 %705
        %707 = vadd.xlane.f32.xlu0 %v676
        %v708 = vpop.xlane.xlu0 %707
        %709 = vadd.xlane.f32.xlu0 %v678
        %v710 = vpop.xlane.xlu0 %709
        %711 = vadd.xlane.f32.xlu0 %v680
        %v712 = vpop.xlane.xlu0 %711
        %713 = vadd.xlane.f32.xlu0 %v682
        %v714 = vpop.xlane.xlu0 %713
        %715 = vadd.xlane.f32.xlu0 %v684
        %v716 = vpop.xlane.xlu0 %715
        %717 = vadd.xlane.f32.xlu0 %v686
        %v718 = vpop.xlane.xlu0 %717
        %719 = vadd.xlane.f32.xlu0 %v688
        %v720 = vpop.xlane.xlu0 %719
        %721 = vadd.xlane.f32.xlu0 %v690
        %v722 = vpop.xlane.xlu0 %721
        %723 = vadd.xlane.f32.xlu0 %v692
        %v724 = vpop.xlane.xlu0 %723
        %725 = vadd.xlane.f32.xlu0 %v694
        %v726 = vpop.xlane.xlu0 %725
        %727 = vadd.xlane.f32.xlu0 %v696
        %v728 = vpop.xlane.xlu0 %727
        %729 = vadd.xlane.f32.xlu0 %v698
        %v730 = vpop.xlane.xlu0 %729
        %v731 = vrcp.pop %v700
        %v732 = vrcp.pop %v702
        %v733 = vrcp.pop %v704
        %v734 = vrcp.pop %v706
        %v735 = vrcp.pop %v708
        %v736 = vrcp.pop %v710
        %v737 = vrcp.pop %v712
        %v738 = vrcp.pop %v714
        %v739 = vrcp.pop %v716
        %v740 = vrcp.pop %v718
        %v741 = vrcp.pop %v720
        %v742 = vrcp.pop %v722
        %v743 = vrcp.pop %v724
        %v744 = vrcp.pop %v726
        %v745 = vrcp.pop %v728
        %v746 = vrcp.pop %v730
        %v747 = vmul.f32 %v668, %v731
        %v748 = vmul.f32 %v670, %v732
        %v749 = vmul.f32 %v672, %v733
        %v750 = vmul.f32 %v674, %v734
        %v751 = vmul.f32 %v676, %v735
        %v752 = vmul.f32 %v678, %v736
        %v753 = vmul.f32 %v680, %v737
        %v754 = vmul.f32 %v682, %v738
        %v755 = vmul.f32 %v684, %v739
        %v756 = vmul.f32 %v686, %v740
        %v757 = vmul.f32 %v688, %v741
        %v758 = vmul.f32 %v690, %v742
        %v759 = vmul.f32 %v692, %v743
        %v760 = vmul.f32 %v694, %v744
        %v761 = vmul.f32 %v696, %v745
        %v762 = vmul.f32 %v698, %v746
        %763 = vst [vmem:[%s262] sm:$0xff] %v747
        %764 = vst [vmem:[%s262 + $0x8] sm:$0xff] %v748
        %765 = vst [vmem:[%s262 + $0x10] sm:$0xff] %v749
        %766 = vst [vmem:[%s262 + $0x18] sm:$0xff] %v750
        %767 = vst [vmem:[%s262 + $0x20] sm:$0xff] %v751
        %768 = vst [vmem:[%s262 + $0x28] sm:$0xff] %v752
        %769 = vst [vmem:[%s262 + $0x30] sm:$0xff] %v753
        %770 = vst [vmem:[%s262 + $0x38] sm:$0xff] %v754
        %771 = vst [vmem:[%s262 + $0x40] sm:$0xff] %v755
        %772 = vst [vmem:[%s262 + $0x48] sm:$0xff] %v756
        %773 = vst [vmem:[%s262 + $0x50] sm:$0xff] %v757
        %774 = vst [vmem:[%s262 + $0x58] sm:$0xff] %v758
        %775 = vst [vmem:[%s262 + $0x60] sm:$0xff] %v759
        %776 = vst [vmem:[%s262 + $0x68] sm:$0xff] %v760
        %777 = vst [vmem:[%s262 + $0x70] sm:$0xff] %v761
        %778 = vst [vmem:[%s262 + $0x78] sm:$0xff] %v762
        %v779 = vpack.c.bf16 %v748, %v747
        %v780 = vpack.c.bf16 %v750, %v749
        %v781 = vpack.c.bf16 %v752, %v751
        %v782 = vpack.c.bf16 %v754, %v753
        %v783 = vpack.c.bf16 %v756, %v755
        %v784 = vpack.c.bf16 %v758, %v757
        %v785 = vpack.c.bf16 %v760, %v759
        %v786 = vpack.c.bf16 %v762, %v761
        %787 = vmatprep.subr.bf16.mxu0 %v472
        %788 = vmatpush1.bf16.msra.mxu0 %v471
        %789 = vmatprep.subr.bf16.mxu0 %v470
        %790 = vmatpush1.bf16.msra.mxu0 %v469
        %791 = vmatprep.subr.bf16.mxu0 %v468
        %792 = vmatpush1.bf16.msra.mxu0 %v467
        %793 = vmatprep.subr.bf16.mxu0 %v466
        %794 = vmatpush1.bf16.msra.mxu0 %v465
        %795 = vmatprep.subr.bf16.mxu0 %v464
        %796 = vmatpush1.bf16.msra.mxu0 %v463
        %797 = vmatprep.subr.bf16.mxu0 %v462
        %798 = vmatpush1.bf16.msra.mxu0 %v461
        %799 = vmatprep.subr.bf16.mxu0 %v460
        %800 = vmatpush1.bf16.msra.mxu0 %v459
        %801 = vmatprep.subr.bf16.mxu0 %v458
        %802 = vmatpush1.bf16.msra.mxu0 %v457
        %803 = vmatprep.subr.bf16.mxu0 0
        %804 = vmatpush2.bf16.msra.mxu0 0
        %805 = vmatprep.subr.bf16.mxu0 0
        %806 = vmatpush2.bf16.msra.mxu0 0
        %807 = vmatprep.subr.bf16.mxu0 0
        %808 = vmatpush2.bf16.msra.mxu0 0
        %809 = vmatprep.subr.bf16.mxu0 0
        %810 = vmatpush2.bf16.msra.mxu0 0
        %811 = vmatprep.subr.bf16.mxu0 0
        %812 = vmatpush2.bf16.msra.mxu0 0
        %813 = vmatprep.subr.bf16.mxu0 0
        %814 = vmatpush2.bf16.msra.mxu0 0
        %815 = vmatprep.subr.bf16.mxu0 0
        %816 = vmatpush2.bf16.msra.mxu0 0
        %817 = vmatprep.subr.bf16.mxu0 0
        %818 = vmatpush2.bf16.msra.mxu0 0
        %819 = vmatprep.mubr.bf16.mxu0 0
        %820 = vmatmul.mubr.bf16.gmra.mxu0 %v779
        %v821 = vpop.f32.mrf.mxu0
        %v822 = vadd.f32 0.0, %v821
        %v823 = vpop.f32.mrf.mxu0
        %v824 = vadd.f32 0.0, %v823
        %v825 = vpop.f32.mrf.mxu0
        %v826 = vadd.f32 0.0, %v825
        %v827 = vpop.f32.mrf.mxu0
        %v828 = vadd.f32 0.0, %v827
        %829 = vmatprep.mubr.bf16.mxu0 0
        %830 = vmatmul.mubr.bf16.gmra.mxu0 %v780
        %v831 = vpop.f32.mrf.mxu0
        %v832 = vadd.f32 0.0, %v831
        %v833 = vpop.f32.mrf.mxu0
        %v834 = vadd.f32 0.0, %v833
        %v835 = vpop.f32.mrf.mxu0
        %v836 = vadd.f32 0.0, %v835
        %v837 = vpop.f32.mrf.mxu0
        %v838 = vadd.f32 0.0, %v837
        %839 = vmatprep.mubr.bf16.mxu0 0
        %840 = vmatmul.mubr.bf16.gmra.mxu0 %v781
        %v841 = vpop.f32.mrf.mxu0
        %v842 = vadd.f32 0.0, %v841
        %v843 = vpop.f32.mrf.mxu0
        %v844 = vadd.f32 0.0, %v843
        %v845 = vpop.f32.mrf.mxu0
        %v846 = vadd.f32 0.0, %v845
        %v847 = vpop.f32.mrf.mxu0
        %v848 = vadd.f32 0.0, %v847
        %849 = vmatprep.mubr.bf16.mxu0 0
        %850 = vmatmul.mubr.bf16.gmra.mxu0 %v782
        %v851 = vpop.f32.mrf.mxu0
        %v852 = vadd.f32 0.0, %v851
        %v853 = vpop.f32.mrf.mxu0
        %v854 = vadd.f32 0.0, %v853
        %v855 = vpop.f32.mrf.mxu0
        %v856 = vadd.f32 0.0, %v855
        %v857 = vpop.f32.mrf.mxu0
        %v858 = vadd.f32 0.0, %v857
        %859 = vmatprep.mubr.bf16.mxu0 0
        %860 = vmatmul.mubr.bf16.gmra.mxu0 %v783
        %v861 = vpop.f32.mrf.mxu0
        %v862 = vadd.f32 0.0, %v861
        %v863 = vpop.f32.mrf.mxu0
        %v864 = vadd.f32 0.0, %v863
        %v865 = vpop.f32.mrf.mxu0
        %v866 = vadd.f32 0.0, %v865
        %v867 = vpop.f32.mrf.mxu0
        %v868 = vadd.f32 0.0, %v867
        %869 = vmatprep.mubr.bf16.mxu0 0
        %870 = vmatmul.mubr.bf16.gmra.mxu0 %v784
        %v871 = vpop.f32.mrf.mxu0
        %v872 = vadd.f32 0.0, %v871
        %v873 = vpop.f32.mrf.mxu0
        %v874 = vadd.f32 0.0, %v873
        %v875 = vpop.f32.mrf.mxu0
        %v876 = vadd.f32 0.0, %v875
        %v877 = vpop.f32.mrf.mxu0
        %v878 = vadd.f32 0.0, %v877
        %879 = vmatprep.mubr.bf16.mxu0 0
        %880 = vmatmul.mubr.bf16.gmra.mxu0 %v785
        %v881 = vpop.f32.mrf.mxu0
        %v882 = vadd.f32 0.0, %v881
        %v883 = vpop.f32.mrf.mxu0
        %v884 = vadd.f32 0.0, %v883
        %v885 = vpop.f32.mrf.mxu0
        %v886 = vadd.f32 0.0, %v885
        %v887 = vpop.f32.mrf.mxu0
        %v888 = vadd.f32 0.0, %v887
        %889 = vmatprep.mubr.bf16.mxu0 0
        %890 = vmatmul.mubr.bf16.gmra.mxu0 %v786
        %v891 = vpop.f32.mrf.mxu0
        %v892 = vadd.f32 0.0, %v891
        %v893 = vpop.f32.mrf.mxu0
        %v894 = vadd.f32 0.0, %v893
        %v895 = vpop.f32.mrf.mxu0
        %v896 = vadd.f32 0.0, %v895
        %v897 = vpop.f32.mrf.mxu0
        %v898 = vadd.f32 0.0, %v897
        %899 = vdwg.mxu0
        %900 = vst [vmem:[%s293] sm:$0xff] %v822
        %901 = vst.msk [vmem:[%s293 + $0x8] sm:$0xff] %vm473, %v824
        %902 = vst [vmem:[%s293 + $0x10] sm:$0xff] %v826
        %903 = vst.msk [vmem:[%s293 + $0x18] sm:$0xff] %vm473, %v828
        %904 = vst [vmem:[%s293 + $0x20] sm:$0xff] %v832
        %905 = vst.msk [vmem:[%s293 + $0x28] sm:$0xff] %vm473, %v834
        %906 = vst [vmem:[%s293 + $0x30] sm:$0xff] %v836
        %907 = vst.msk [vmem:[%s293 + $0x38] sm:$0xff] %vm473, %v838
        %908 = vst [vmem:[%s293 + $0x40] sm:$0xff] %v842
        %909 = vst.msk [vmem:[%s293 + $0x48] sm:$0xff] %vm473, %v844
        %910 = vst [vmem:[%s293 + $0x50] sm:$0xff] %v846
        %911 = vst.msk [vmem:[%s293 + $0x58] sm:$0xff] %vm473, %v848
        %912 = vst [vmem:[%s293 + $0x60] sm:$0xff] %v852
        %913 = vst.msk [vmem:[%s293 + $0x68] sm:$0xff] %vm473, %v854
        %914 = vst [vmem:[%s293 + $0x70] sm:$0xff] %v856
        %915 = vst.msk [vmem:[%s293 + $0x78] sm:$0xff] %vm473, %v858
        %916 = vst [vmem:[%s293 + $0x80] sm:$0xff] %v862
        %917 = vst.msk [vmem:[%s293 + $0x88] sm:$0xff] %vm473, %v864
        %918 = vst [vmem:[%s293 + $0x90] sm:$0xff] %v866
        %919 = vst.msk [vmem:[%s293 + $0x98] sm:$0xff] %vm473, %v868
        %920 = vst [vmem:[%s293 + $0xa0] sm:$0xff] %v872
        %921 = vst.msk [vmem:[%s293 + $0xa8] sm:$0xff] %vm473, %v874
        %922 = vst [vmem:[%s293 + $0xb0] sm:$0xff] %v876
        %923 = vst.msk [vmem:[%s293 + $0xb8] sm:$0xff] %vm473, %v878
        %924 = vst [vmem:[%s293 + $0xc0] sm:$0xff] %v882
        %925 = vst.msk [vmem:[%s293 + $0xc8] sm:$0xff] %vm473, %v884
        %926 = vst [vmem:[%s293 + $0xd0] sm:$0xff] %v886
        %927 = vst.msk [vmem:[%s293 + $0xd8] sm:$0xff] %vm473, %v888
        %928 = vst [vmem:[%s293 + $0xe0] sm:$0xff] %v892
        %929 = vst.msk [vmem:[%s293 + $0xe8] sm:$0xff] %vm473, %v894
        %930 = vst [vmem:[%s293 + $0xf0] sm:$0xff] %v896
        %931 = vst.msk [vmem:[%s293 + $0xf8] sm:$0xff] %vm473, %v898
        %s932 = smul.u32 16, %s24
        %p933 = scmp.lt.s32.totalorder %s23, 7
        %s934 = scalar_select %p933, %s23, 7
        %p935 = scmp.lt.s32.totalorder %s932, 15
        %s936 = scalar_select %p935, %s932, 15
        %s937 = smul.addr %s936, 2
        %s938 = smul.addr %s934, 32
        %s939 = sadd.s32 %s937, %s938
        %s940 = smul.addr %s939, 8
        %s941 = scalar_lea.vmem %s3, %s940
        %s942 = sand.u32 %s149, 1
        %s943 = scalar_lea.sflag [#allocation3], %s942
        %s944 = sand.u32 %s149, 1
        %s945 = smul.addr %s944, 128
        %s946 = scalar_lea.vmem [#allocation2], %s945
        // Predicated region
        $region33: #{tpu_custom_call.1} parent=31 // pred_check
          %p947 = pneg %p131
        $region34: #{tpu_custom_call.1} parent=31 // pred_check_branch
          %949 = sbr.rel (%p947) target = $region36
        $region35: #{tpu_custom_call.1} parent=31 // pred_region
          %s950 = smul.u32 16, %s24
        $region36: #{tpu_custom_call.1} parent=31 // pred_fallthru
          _
        // Predicated region
        $region37: #{tpu_custom_call.1} parent=31 // pred_check
          %p951 = pneg %p159
        $region38: #{tpu_custom_call.1} parent=31 // pred_check_branch
          %953 = sbr.rel (%p951) target = $region40
        $region39: #{tpu_custom_call.1} parent=31 // pred_region
          %s954 = smul.u32 16, %s24
          %s956 = ssub.s32 2048, 2048
          %957 = vsyncadd %s943, %s956
          %s958 = smul.addr %s23, 16
          %s959 = sadd.s32 %s954, %s958
          %s960 = smul.addr %s959, 128
          %s961 = scalar_lea.hbm %s4, %s960
          %s962 = sshll.u32 %s946, 4
          %s963 = int_to_ptr.vmem [resolvable:$true] %s962
          %968 = dma.vmem_to_hbm [thread:$0]  %s963, 2048, %s961, %s943, 128, 128, 8
        $region40: #{tpu_custom_call.1} parent=31 // pred_fallthru
          _
      $region32: #{tpu_custom_call.1} parent=5 // pred_fallthru
        _
      %p969 = scmp.le.s32.totalorder 2, %s14
      // Predicated region
      $region41: #{tpu_custom_call.1} parent=5 // pred_check
        %p970 = pneg %p969
      $region42: #{tpu_custom_call.1} parent=5 // pred_check_branch
        %972 = sbr.rel (%p970) target = $region44
      $region43: #{tpu_custom_call.1} parent=5 // pred_region
        %s973 = ssub.s32 %s14, 2
        // Predicated region
        $region45: #{tpu_custom_call.1} parent=43 // pred_check
          %p974 = pneg %p137
        $region46: #{tpu_custom_call.1} parent=43 // pred_check_branch
          %976 = sbr.rel (%p974) target = $region48
        $region47: #{tpu_custom_call.1} parent=43 // pred_region
          %s977 = smul.u32 16, %s26
          %p978 = scmp.lt.s32.totalorder %s25, 7
          %s979 = scalar_select %p978, %s25, 7
          %p980 = scmp.lt.s32.totalorder %s977, 15
          %s981 = scalar_select %p980, %s977, 15
          %s982 = smul.addr %s981, 2
          %s983 = smul.addr %s979, 32
          %s984 = sadd.s32 %s982, %s983
          %s985 = smul.addr %s984, 8
          %s986 = scalar_lea.vmem %s3, %s985
        $region48: #{tpu_custom_call.1} parent=43 // pred_fallthru
          _
        // Predicated region
        $region49: #{tpu_custom_call.1} parent=43 // pred_check
          %p987 = pneg %p165
        $region50: #{tpu_custom_call.1} parent=43 // pred_check_branch
          %989 = sbr.rel (%p987) target = $region52
        $region51: #{tpu_custom_call.1} parent=43 // pred_region
          %s990 = sand.u32 %s150, 1
          %s991 = scalar_lea.sflag [#allocation3], %s990
          %s992 = sand.u32 %s150, 1
          %s993 = smul.addr %s992, 128
          %s994 = scalar_lea.vmem [#allocation2], %s993
          %995 = dma.done %s991, 2048
        $region52: #{tpu_custom_call.1} parent=43 // pred_fallthru
          _
      $region44: #{tpu_custom_call.1} parent=5 // pred_fallthru
        _
    $region6: #{tpu_custom_call.1} parent=1 // loop_footer
      %s18 = sadd.s32 1, %s14
    $region7: #{tpu_custom_call.1} parent=1 // loop_footer_branch
      %13 = sbr.rel target = $region3
    $region8: #{tpu_custom_call.1} parent=1 // loop_exit
      _
    %996 = vsyncpa [#allocation3], 1
    %s997 = scalar_lea.sflag [#allocation3], 1
    %998 = vsyncpa %s997, 1

</llo_original>
